<compile_context>
chip_gen: v6e
topology: v6e:2x2x1
jax: 0.10.0
libtpu: 0.0.40
codegen_flags: <defaults>
</compile_context>

<pallas_src>
import functools

import jax
import jax.numpy as jnp
from jax.experimental import pallas as pl
from jax.experimental.pallas import tpu as pltpu

_LANES = 128     # vreg lane width
_SUBROWS = 32    # rows per register-resident accumulation sub-block


def _round_up(x, m):
    return (x + m - 1) // m * m


def _tile_stats(x1_ref, x2_ref, rows, lane_tiles, sh1, sh2):
    """Shifted sufficient statistics for one (SUBROWS, ...) sub-block.

    lane_tiles is a static tuple of (lane_tile_index, n_valid_lanes); lane
    tiles that are entirely out of range are simply not listed, and a partially
    valid tile is masked with an iota compare.  Returns five (SUBROWS, 128)
    f32 per-lane partial sums (cross-lane reduction happens later).
    """
    zero = jnp.zeros((_SUBROWS, _LANES), jnp.float32)
    a1, a2, a11, a22, a12 = zero, zero, zero, zero, zero
    for k, n_valid in lane_tiles:
        x1 = x1_ref[rows, pl.ds(k * _LANES, _LANES)].astype(jnp.float32)
        x2 = x2_ref[rows, pl.ds(k * _LANES, _LANES)].astype(jnp.float32)
        y1 = x1 - sh1
        y2 = x2 - sh2
        if n_valid < _LANES:
            lane = jax.lax.broadcasted_iota(jnp.int32, (_SUBROWS, _LANES), 1)
            valid = lane < n_valid
            y1 = jnp.where(valid, y1, 0.0)
            y2 = jnp.where(valid, y2, 0.0)
        a1 = a1 + y1
        a2 = a2 + y2
        a11 = a11 + y1 * y1
        a22 = a22 + y2 * y2
        a12 = a12 + y1 * y2
    return a1, a2, a11, a22, a12


def _scores(s1, s2, s11, s22, s12, *, hw, eps, inv_chw):
    """Per-row NCC contribution from (shifted) sums; all shapes (rows, 1)."""
    inv_n = 1.0 / float(hw)
    mu1 = s1 * inv_n
    mu2 = s2 * inv_n
    var1 = s11 * inv_n - mu1 * mu1 + eps   # correction=0; eps before the sqrt
    var2 = s22 * inv_n - mu2 * mu2 + eps
    cross = s12 - (float(hw) * mu1) * mu2  # sum_hw (x1-mu1)(x2-mu2)
    return cross * jax.lax.rsqrt(var1) * jax.lax.rsqrt(var2) * inv_chw


def _ncc_kernel_single(x1_ref, x2_ref, out_ref, *, hw, eps, inv_chw, lane_tiles):
    """One HW chunk covers the whole image: fused single-pass, no scratch."""
    row_tile = x1_ref.shape[0]

    def body(r, carry):
        rs = pl.multiple_of(r * _SUBROWS, _SUBROWS)
        rows = pl.ds(rs, _SUBROWS)
        # Per-row shift = the row's first element (cancellation guard).
        sh1 = jnp.broadcast_to(
            x1_ref[rows, pl.ds(0, 1)].astype(jnp.float32), (_SUBROWS, _LANES))
        sh2 = jnp.broadcast_to(
            x2_ref[rows, pl.ds(0, 1)].astype(jnp.float32), (_SUBROWS, _LANES))
        a1, a2, a11, a22, a12 = _tile_stats(
            x1_ref, x2_ref, rows, lane_tiles, sh1, sh2)
        s1 = jnp.sum(a1, axis=-1, keepdims=True)
        s2 = jnp.sum(a2, axis=-1, keepdims=True)
        s11 = jnp.sum(a11, axis=-1, keepdims=True)
        s22 = jnp.sum(a22, axis=-1, keepdims=True)
        s12 = jnp.sum(a12, axis=-1, keepdims=True)
        out_ref[rows, :] = _scores(s1, s2, s11, s22, s12, hw=hw, eps=eps,
                                   inv_chw=inv_chw).astype(out_ref.dtype)
        return carry

    jax.lax.fori_loop(0, row_tile // _SUBROWS, body, 0)


def _ncc_kernel_multi(x1_ref, x2_ref, out_ref,
                      sh1_ref, sh2_ref, s1_ref, s2_ref, s11_ref, s22_ref, s12_ref,
                      *, hw, eps, inv_chw, num_j, full_tiles, last_tiles):
    """Multiple HW chunks: lane-dense accumulators carried across the j axis."""
    j = pl.program_id(1)
    row_tile = s1_ref.shape[0]
    n_sub = row_tile // _SUBROWS

    @pl.when(j == 0)
    def _init():
        # Per-row shift (first pixel) + zeroed lane-dense accumulators.
        sh1_ref[...] = jnp.broadcast_to(
            x1_ref[:, pl.ds(0, 1)].astype(jnp.float32), sh1_ref.shape)
        sh2_ref[...] = jnp.broadcast_to(
            x2_ref[:, pl.ds(0, 1)].astype(jnp.float32), sh2_ref.shape)
        s1_ref[...] = jnp.zeros_like(s1_ref)
        s2_ref[...] = jnp.zeros_like(s2_ref)
        s11_ref[...] = jnp.zeros_like(s11_ref)
        s22_ref[...] = jnp.zeros_like(s22_ref)
        s12_ref[...] = jnp.zeros_like(s12_ref)

    def accumulate(lane_tiles):
        def body(r, carry):
            rs = pl.multiple_of(r * _SUBROWS, _SUBROWS)
            rows = pl.ds(rs, _SUBROWS)
            sh1 = sh1_ref[rows, :]
            sh2 = sh2_ref[rows, :]
            a1, a2, a11, a22, a12 = _tile_stats(
                x1_ref, x2_ref, rows, lane_tiles, sh1, sh2)
            s1_ref[rows, :] += a1
            s2_ref[rows, :] += a2
            s11_ref[rows, :] += a11
            s22_ref[rows, :] += a22
            s12_ref[rows, :] += a12
            return carry
        jax.lax.fori_loop(0, n_sub, body, 0)

    if last_tiles == full_tiles:             # H*W divides the chunk evenly
        accumulate(full_tiles)
    else:
        @pl.when(j < num_j - 1)              # hot path: no masking at all
        def _full():
            accumulate(full_tiles)

        @pl.when(j == num_j - 1)             # ragged tail: skip/mask lane tiles
        def _ragged():
            accumulate(last_tiles)

    @pl.when(j == num_j - 1)
    def _finalize():
        s1 = jnp.sum(s1_ref[...], axis=-1, keepdims=True)
        s2 = jnp.sum(s2_ref[...], axis=-1, keepdims=True)
        s11 = jnp.sum(s11_ref[...], axis=-1, keepdims=True)
        s22 = jnp.sum(s22_ref[...], axis=-1, keepdims=True)
        s12 = jnp.sum(s12_ref[...], axis=-1, keepdims=True)
        out_ref[...] = _scores(s1, s2, s11, s22, s12, hw=hw, eps=eps,
                               inv_chw=inv_chw).astype(out_ref.dtype)


def _pick_tiles(bc, hw, itemsize, row_tile=None, hw_tile=None):
    """Adaptive, dtype-aware (row_tile, hw_tile) for the (B*C, H*W) layout."""
    itemsize = int(itemsize)
    hw_padded = _round_up(hw, _LANES)
    target_bytes = 4 * 1024 * 1024                       # ~4 MiB / input block
    if hw_tile is None:
        base_cap = {4: 4096, 2: 8192, 1: 16384}.get(itemsize, 4096)
        # Widen the lane tile when only a few rows exist so each grid step
        # still moves a few MiB (keeps the ~0.35us/step overhead amortized).
        rows_avail = _round_up(min(bc, 1024), _SUBROWS)
        want_lanes = _round_up(pl.cdiv(target_bytes, rows_avail * itemsize), _LANES)
        hw_tile = min(hw_padded, max(base_cap, want_lanes), 16384)
    if row_tile is None:
        row_tile = max(_SUBROWS, target_bytes // (hw_tile * itemsize))
        row_tile = min(1024, _round_up(row_tile, _SUBROWS))
        n_blocks = pl.cdiv(bc, row_tile)
        if n_blocks < 2 and bc > _SUBROWS:
            n_blocks = 2                                  # keep both v7x TCs busy
        row_tile = min(row_tile, _round_up(pl.cdiv(bc, n_blocks), _SUBROWS))
    assert row_tile % _SUBROWS == 0 and hw_tile % _LANES == 0
    return row_tile, hw_tile


def normalized_cross_correlation_2d(x1, x2, eps=1e-5, *, row_tile=None, hw_tile=None):
    """x1, x2: (B, C, H, W) arrays. Returns (B,) float32 NCC scores."""
    b, c, h, w = x1.shape
    assert x2.shape == x1.shape
    bc, hw = b * c, h * w

    # Free (contiguous) view: (b,c) rows dense on sublanes, H*W on lanes.
    x1f = x1.reshape(bc, hw)
    x2f = x2.reshape(bc, hw)
    itemsize = jnp.dtype(x1.dtype).itemsize
    row_tile, hw_tile = _pick_tiles(bc, hw, itemsize, row_tile, hw_tile)

    num_i = pl.cdiv(bc, row_tile)
    num_j = pl.cdiv(hw, hw_tile)
    rem = hw - (num_j - 1) * hw_tile                     # valid cols, last chunk
    full_tiles = tuple((k, _LANES) for k in range(hw_tile // _LANES))
    last_tiles = tuple((k, min(_LANES, rem - k * _LANES))
                       for k in range(pl.cdiv(rem, _LANES)))

    inv_chw = 1.0 / float(c * h * w)
    compiler_params = pltpu.CompilerParams(
        dimension_semantics=("parallel",) if num_j == 1 else ("parallel", "arbitrary"),
        # Worst-case footprint ~18 MiB exceeds v5e's 16 MiB scoped-VMEM default.
        vmem_limit_bytes=32 * 1024 * 1024,
    )
    out_shape = jax.ShapeDtypeStruct((bc, 1), jnp.float32)

    if num_j == 1:
        kernel = functools.partial(_ncc_kernel_single, hw=hw, eps=float(eps),
                                   inv_chw=inv_chw, lane_tiles=last_tiles)
        per_row = pl.pallas_call(
            kernel,
            out_shape=out_shape,
            grid=(num_i,),
            in_specs=[pl.BlockSpec((row_tile, hw_tile), lambda i: (i, 0)),
                      pl.BlockSpec((row_tile, hw_tile), lambda i: (i, 0))],
            out_specs=pl.BlockSpec((row_tile, 1), lambda i: (i, 0)),
            compiler_params=compiler_params,
        )(x1f, x2f)
    else:
        kernel = functools.partial(_ncc_kernel_multi, hw=hw, eps=float(eps),
                                   inv_chw=inv_chw, num_j=num_j,
                                   full_tiles=full_tiles, last_tiles=last_tiles)
        per_row = pl.pallas_call(
            kernel,
            out_shape=out_shape,
            grid=(num_i, num_j),
            in_specs=[pl.BlockSpec((row_tile, hw_tile), lambda i, j: (i, j)),
                      pl.BlockSpec((row_tile, hw_tile), lambda i, j: (i, j))],
            out_specs=pl.BlockSpec((row_tile, 1), lambda i, j: (i, 0)),
            scratch_shapes=[pltpu.VMEM((row_tile, _LANES), jnp.float32)
                            for _ in range(7)],
            compiler_params=compiler_params,
        )(x1f, x2f)

    # Only a tiny (B*C,) -> (B,) channel sum remains outside the kernel.
    return per_row[:bc, 0].reshape(b, c).sum(axis=1)


def _reference(x1, x2, eps=1e-5):
    # Pure-JAX reference mirroring the PyTorch forward (two-pass normalize).
    def norm(x):
        mu = x.mean(axis=(-1, -2), keepdims=True)
        var = ((x - mu) ** 2).mean(axis=(-1, -2), keepdims=True) + eps
        return (x - mu) / jnp.sqrt(var)

    _, c, h, w = x1.shape
    return jnp.einsum("bchw,bchw->b", norm(x1), norm(x2)) / (c * h * w)


if __name__ == "__main__":
    key = jax.random.PRNGKey(0)
    k1, k2 = jax.random.split(key)

    # Main check: module-sized example (single-HW-chunk fused path).
    B, C, H, W = 2, 4, 16, 16
    x1 = jax.random.normal(k1, (B, C, H, W), dtype=jnp.float32)
    x2 = jax.random.normal(k2, (B, C, H, W), dtype=jnp.float32)
    out = jax.block_until_ready(normalized_cross_correlation_2d(x1, x2))
    ref = _reference(x1, x2)
    assert out.shape == (B,), out.shape
    assert jnp.allclose(out, ref, atol=2e-5, rtol=2e-4), (out, ref)

    # Second check: force the multi-chunk path with a ragged H*W tail and a
    # large DC offset (exercises in-kernel masking and the mean-shift).
    B2, C2, H2, W2 = 2, 3, 13, 13
    k3, k4 = jax.random.split(k2)
    y1 = 200.0 + 5.0 * jax.random.normal(k3, (B2, C2, H2, W2), dtype=jnp.float32)
    y2 = 200.0 + 5.0 * jax.random.normal(k4, (B2, C2, H2, W2), dtype=jnp.float32)
    out2 = jax.block_until_ready(
        normalized_cross_correlation_2d(y1, y2, row_tile=32, hw_tile=128))
    ref2 = _reference(y1, y2)
    assert jnp.allclose(out2, ref2, atol=2e-4, rtol=2e-3), (out2, ref2)

    print("KERNEL_OK")
</pallas_src>

<mosaic_0001>
module attributes {stable_mosaic.version = 11 : i64} {
  func.func @_ncc_kernel_single(%arg0: i32, %arg1: memref<32x256xf32, #tpu.memory_space<vmem>>, %arg2: memref<32x256xf32, #tpu.memory_space<vmem>>, %arg3: memref<32x1xf32, #tpu.memory_space<vmem>>) attributes {dimension_semantics = [#tpu.dimension_semantics<parallel>], iteration_bounds = array<i64: 1>, scalar_prefetch = 0 : i64, scratch_operands = 0 : i64, tpu.core_type = #tpu.core_type<tc>, window_params = [{transform_indices = @transform_0, window_bounds = array<i64: 32, 256>}, {transform_indices = @transform_1, window_bounds = array<i64: 32, 256>}, {transform_indices = @transform_2, window_bounds = array<i64: 32, 1>}]} {
    %c0_i32 = arith.constant 0 : i32
    %c32_i32 = arith.constant 32 : i32
    %0 = arith.muli %c0_i32, %c32_i32 : i32
    %1 = tpu.assume_multiple %0, 32 : i32
    %2 = arith.index_cast %1 : i32 to index
    %c0 = arith.constant 0 : index
    %3 = vector.load %arg1[%2, %c0] : memref<32x256xf32, #tpu.memory_space<vmem>>, vector<32x1xf32>
    %4 = vector.shape_cast %3 : vector<32x1xf32> to vector<32x1xf32>
    %5 = vector.broadcast %4 : vector<32x1xf32> to vector<32x128xf32>
    %6 = arith.index_cast %1 : i32 to index
    %c0_0 = arith.constant 0 : index
    %7 = vector.load %arg2[%6, %c0_0] : memref<32x256xf32, #tpu.memory_space<vmem>>, vector<32x1xf32>
    %8 = vector.shape_cast %7 : vector<32x1xf32> to vector<32x1xf32>
    %9 = vector.broadcast %8 : vector<32x1xf32> to vector<32x128xf32>
    %cst = arith.constant 0.000000e+00 : f32
    %10 = vector.broadcast %cst : f32 to vector<32x128xf32>
    %11 = arith.index_cast %1 : i32 to index
    %c0_1 = arith.constant 0 : index
    %12 = vector.load %arg1[%11, %c0_1] : memref<32x256xf32, #tpu.memory_space<vmem>>, vector<32x128xf32>
    %13 = arith.index_cast %1 : i32 to index
    %c0_2 = arith.constant 0 : index
    %14 = vector.load %arg2[%13, %c0_2] : memref<32x256xf32, #tpu.memory_space<vmem>>, vector<32x128xf32>
    %15 = arith.subf %12, %5 : vector<32x128xf32>
    %16 = arith.subf %14, %9 : vector<32x128xf32>
    %17 = arith.addf %10, %15 : vector<32x128xf32>
    %18 = arith.addf %10, %16 : vector<32x128xf32>
    %19 = arith.mulf %15, %15 : vector<32x128xf32>
    %20 = arith.addf %10, %19 : vector<32x128xf32>
    %21 = arith.mulf %16, %16 : vector<32x128xf32>
    %22 = arith.addf %10, %21 : vector<32x128xf32>
    %23 = arith.mulf %15, %16 : vector<32x128xf32>
    %24 = arith.addf %10, %23 : vector<32x128xf32>
    %25 = arith.index_cast %1 : i32 to index
    %c128 = arith.constant 128 : index
    %26 = vector.load %arg1[%25, %c128] : memref<32x256xf32, #tpu.memory_space<vmem>>, vector<32x128xf32>
    %27 = arith.index_cast %1 : i32 to index
    %c128_3 = arith.constant 128 : index
    %28 = vector.load %arg2[%27, %c128_3] : memref<32x256xf32, #tpu.memory_space<vmem>>, vector<32x128xf32>
    %29 = arith.subf %26, %5 : vector<32x128xf32>
    %30 = arith.subf %28, %9 : vector<32x128xf32>
    %31 = arith.addf %17, %29 : vector<32x128xf32>
    %32 = arith.addf %18, %30 : vector<32x128xf32>
    %33 = arith.mulf %29, %29 : vector<32x128xf32>
    %34 = arith.addf %20, %33 : vector<32x128xf32>
    %35 = arith.mulf %30, %30 : vector<32x128xf32>
    %36 = arith.addf %22, %35 : vector<32x128xf32>
    %37 = arith.mulf %29, %30 : vector<32x128xf32>
    %38 = arith.addf %24, %37 : vector<32x128xf32>
    %cst_4 = arith.constant dense<0.000000e+00> : vector<32xf32>
    %39 = vector.multi_reduction <add>, %31, %cst_4 [1] : vector<32x128xf32> to vector<32xf32>
    %40 = vector.shape_cast %39 : vector<32xf32> to vector<32x1xf32>
    %cst_5 = arith.constant dense<0.000000e+00> : vector<32xf32>
    %41 = vector.multi_reduction <add>, %32, %cst_5 [1] : vector<32x128xf32> to vector<32xf32>
    %42 = vector.shape_cast %41 : vector<32xf32> to vector<32x1xf32>
    %cst_6 = arith.constant dense<0.000000e+00> : vector<32xf32>
    %43 = vector.multi_reduction <add>, %34, %cst_6 [1] : vector<32x128xf32> to vector<32xf32>
    %44 = vector.shape_cast %43 : vector<32xf32> to vector<32x1xf32>
    %cst_7 = arith.constant dense<0.000000e+00> : vector<32xf32>
    %45 = vector.multi_reduction <add>, %36, %cst_7 [1] : vector<32x128xf32> to vector<32xf32>
    %46 = vector.shape_cast %45 : vector<32xf32> to vector<32x1xf32>
    %cst_8 = arith.constant dense<0.000000e+00> : vector<32xf32>
    %47 = vector.multi_reduction <add>, %38, %cst_8 [1] : vector<32x128xf32> to vector<32xf32>
    %48 = vector.shape_cast %47 : vector<32xf32> to vector<32x1xf32>
    %cst_9 = arith.constant 3.906250e-03 : f32
    %49 = vector.broadcast %cst_9 : f32 to vector<32x1xf32>
    %50 = arith.mulf %40, %49 : vector<32x1xf32>
    %cst_10 = arith.constant 3.906250e-03 : f32
    %51 = vector.broadcast %cst_10 : f32 to vector<32x1xf32>
    %52 = arith.mulf %42, %51 : vector<32x1xf32>
    %cst_11 = arith.constant 3.906250e-03 : f32
    %53 = vector.broadcast %cst_11 : f32 to vector<32x1xf32>
    %54 = arith.mulf %44, %53 : vector<32x1xf32>
    %55 = arith.mulf %50, %50 : vector<32x1xf32>
    %56 = arith.subf %54, %55 : vector<32x1xf32>
    %cst_12 = arith.constant 9.99999974E-6 : f32
    %57 = vector.broadcast %cst_12 : f32 to vector<32x1xf32>
    %58 = arith.addf %56, %57 : vector<32x1xf32>
    %cst_13 = arith.constant 3.906250e-03 : f32
    %59 = vector.broadcast %cst_13 : f32 to vector<32x1xf32>
    %60 = arith.mulf %46, %59 : vector<32x1xf32>
    %61 = arith.mulf %52, %52 : vector<32x1xf32>
    %62 = arith.subf %60, %61 : vector<32x1xf32>
    %cst_14 = arith.constant 9.99999974E-6 : f32
    %63 = vector.broadcast %cst_14 : f32 to vector<32x1xf32>
    %64 = arith.addf %62, %63 : vector<32x1xf32>
    %cst_15 = arith.constant 2.560000e+02 : f32
    %65 = vector.broadcast %cst_15 : f32 to vector<32x1xf32>
    %66 = arith.mulf %65, %50 : vector<32x1xf32>
    %67 = arith.mulf %66, %52 : vector<32x1xf32>
    %68 = arith.subf %48, %67 : vector<32x1xf32>
    %69 = math.rsqrt %58 : vector<32x1xf32>
    %70 = arith.mulf %68, %69 : vector<32x1xf32>
    %71 = math.rsqrt %64 : vector<32x1xf32>
    %72 = arith.mulf %70, %71 : vector<32x1xf32>
    %cst_16 = arith.constant 9.765625E-4 : f32
    %73 = vector.broadcast %cst_16 : f32 to vector<32x1xf32>
    %74 = arith.mulf %72, %73 : vector<32x1xf32>
    %75 = arith.index_cast %1 : i32 to index
    %c0_17 = arith.constant 0 : index
    %76 = vector.load %arg3[%75, %c0_17] : memref<32x1xf32, #tpu.memory_space<vmem>>, vector<32x1xf32>
    tpu.vector_store %arg3[%75, %c0_17], %74 {strides = array<i32>} : memref<32x1xf32, #tpu.memory_space<vmem>>, vector<32x1xf32>,
    %c1_i32 = arith.constant 1 : i32
    return
  }
  func.func @transform_0(%arg0: i32) -> (i32, i32) {
    %c0_i32 = arith.constant 0 : i32
    %c0_i32_0 = arith.constant 0 : i32
    return %arg0, %c0_i32 : i32, i32
  }
  func.func @transform_1(%arg0: i32) -> (i32, i32) {
    %c0_i32 = arith.constant 0 : i32
    %c0_i32_0 = arith.constant 0 : i32
    return %arg0, %c0_i32 : i32, i32
  }
  func.func @transform_2(%arg0: i32) -> (i32, i32) {
    %c0_i32 = arith.constant 0 : i32
    %c0_i32_0 = arith.constant 0 : i32
    return %arg0, %c0_i32 : i32, i32
  }
}

</mosaic_0001>

<llo_original>
// kernel: tpu_custom_call.1
$region0: #{tpu_custom_call.1}
  #allocation0 [shape = 'u32[]', space=smem, size = 0x4, offset = 0x4, fixed_abs, tag = 'smem constant byte address 0x4 - core index']
  #allocation1 [shape = 'u32[144,128]{1,0:T(1,128)}', space=vmem, size = 0x12000, scoped, tag = 'internal scratch']
  %s0 = inlined_call_operand.hbm [shape: f32[8,256], index: 0, kind: input, shape index: {}]
  %s1 = inlined_call_operand.hbm [shape: f32[8,256], index: 1, kind: input, shape index: {}]
  %s2 = inlined_call_operand.vmem [shape: f32[8,1], index: 2, kind: output, shape index: {}]
  %s3 = sld [smem:[#allocation0]]
  $region60: #{tpu_custom_call.1} parent=0
    _
  %s5 = ssub.s32 1, %s3
  %s6 = scalar_select 0, %s5, %s3
  $region1: #{tpu_custom_call.1} parent=0
    #allocation2 [shape = 'u8[32768]{0}', space=vmem, size = 0x8000, scoped, tag = 'input window, operand 0, single buffered']
    #allocation3 [shape = 's32[1]{0}', space=sflag, size = 0x4, scoped, tag = 'scoped memory for tpu_custom_call.1']
    #allocation4 [shape = 'u8[32768]{0}', space=vmem, size = 0x8000, scoped, tag = 'input window, operand 1, single buffered']
    #allocation5 [shape = 's32[1]{0}', space=sflag, size = 0x4, scoped, tag = 'scoped memory for tpu_custom_call.1']
    #allocation6 [shape = 'u8[16384]{0}', space=vmem, size = 0x4000, scoped, tag = 'output window, operand 0, single buffered']
    %7 = vsyncpa [#allocation3], 0
    %8 = vsyncpa [#allocation5], 0
    // Predicated region
    $region2: #{tpu_custom_call.1} parent=1 // pred_check
      _
    $region3: #{tpu_custom_call.1} parent=1 // pred_check_branch
      %10 = sbr.rel (0) target = $region5
    $region4: #{tpu_custom_call.1} parent=1 // pred_region
      %s12 = ssub.s32 1024, 256
      %13 = vsyncadd [#allocation3], %s12
      %s14 = sshll.u32 [#allocation2], 4
      %s15 = int_to_ptr.vmem [resolvable:$true] %s14
      %20 = dma.hbm_to_vmem [thread:$0]  %s0, 256, %s15, [#allocation3], 256, 256, 16
    $region5: #{tpu_custom_call.1} parent=1 // pred_fallthru
      _
    // Predicated region
    $region6: #{tpu_custom_call.1} parent=1 // pred_check
      _
    $region7: #{tpu_custom_call.1} parent=1 // pred_check_branch
      %22 = sbr.rel (0) target = $region9
    $region8: #{tpu_custom_call.1} parent=1 // pred_region
      %s24 = ssub.s32 1024, 256
      %25 = vsyncadd [#allocation5], %s24
      %s26 = sshll.u32 [#allocation4], 4
      %s27 = int_to_ptr.vmem [resolvable:$true] %s26
      %32 = dma.hbm_to_vmem [thread:$0]  %s1, 256, %s27, [#allocation5], 256, 256, 16
    $region9: #{tpu_custom_call.1} parent=1 // pred_fallthru
      _
    // Predicated region
    $region10: #{tpu_custom_call.1} parent=1 // pred_check
      _
    $region11: #{tpu_custom_call.1} parent=1 // pred_check_branch
      %34 = sbr.rel (0) target = $region13
    $region12: #{tpu_custom_call.1} parent=1 // pred_region
      %35 = dma.done [#allocation3], 1024
    $region13: #{tpu_custom_call.1} parent=1 // pred_fallthru
      _
    // Predicated region
    $region14: #{tpu_custom_call.1} parent=1 // pred_check
      _
    $region15: #{tpu_custom_call.1} parent=1 // pred_check_branch
      %37 = sbr.rel (0) target = $region17
    $region16: #{tpu_custom_call.1} parent=1 // pred_region
      %38 = dma.done [#allocation5], 1024
    $region17: #{tpu_custom_call.1} parent=1 // pred_fallthru
      _
    %s39 = smul.u32 0, 2
    %s40 = smul.addr %s39, 8
    %s41 = scalar_lea.vmem [#allocation2], %s40
    %v42 = vld [vmem:[%s41] sm:$0xff]
    %v43 = vld [vmem:[%s41 + $0x10] sm:$0xff]
    %v44 = vld [vmem:[%s41 + $0x20] sm:$0xff]
    %v45 = vld [vmem:[%s41 + $0x30] sm:$0xff]
    %47 = vset.pattern.permute.xlu0 0
    %48 = vperm.xlu0 %47, %v42
    %v49 = vpop.permute.xlu0 %48
    %52 = vset.pattern.permute.xlu0 0
    %53 = vperm.xlu0 %52, %v43
    %v54 = vpop.permute.xlu0 %53
    %57 = vset.pattern.permute.xlu0 0
    %58 = vperm.xlu0 %57, %v44
    %v59 = vpop.permute.xlu0 %58
    %62 = vset.pattern.permute.xlu0 0
    %63 = vperm.xlu0 %62, %v45
    %v64 = vpop.permute.xlu0 %63
    %s66 = smul.addr %s39, 8
    %s67 = scalar_lea.vmem [#allocation4], %s66
    %v68 = vld [vmem:[%s67] sm:$0xff]
    %v69 = vld [vmem:[%s67 + $0x10] sm:$0xff]
    %v70 = vld [vmem:[%s67 + $0x20] sm:$0xff]
    %v71 = vld [vmem:[%s67 + $0x30] sm:$0xff]
    %73 = vset.pattern.permute.xlu0 0
    %74 = vperm.xlu0 %73, %v68
    %v75 = vpop.permute.xlu0 %74
    %78 = vset.pattern.permute.xlu0 0
    %79 = vperm.xlu0 %78, %v69
    %v80 = vpop.permute.xlu0 %79
    %83 = vset.pattern.permute.xlu0 0
    %84 = vperm.xlu0 %83, %v70
    %v85 = vpop.permute.xlu0 %84
    %88 = vset.pattern.permute.xlu0 0
    %89 = vperm.xlu0 %88, %v71
    %v90 = vpop.permute.xlu0 %89
    %v92 = vsub.f32 %v42, %v49
    %v93 = vsub.f32 %v43, %v54
    %v94 = vsub.f32 %v44, %v59
    %v95 = vsub.f32 %v45, %v64
    %v96 = vsub.f32 %v68, %v75
    %v97 = vsub.f32 %v69, %v80
    %v98 = vsub.f32 %v70, %v85
    %v99 = vsub.f32 %v71, %v90
    %v100 = vadd.f32 %v92, 0.0
    %v101 = vadd.f32 %v93, 0.0
    %v102 = vadd.f32 %v94, 0.0
    %v103 = vadd.f32 %v95, 0.0
    %v104 = vadd.f32 %v96, 0.0
    %v105 = vadd.f32 %v97, 0.0
    %v106 = vadd.f32 %v98, 0.0
    %v107 = vadd.f32 %v99, 0.0
    %v108 = vmul.f32 %v92, %v92
    %v109 = vmul.f32 %v93, %v93
    %v110 = vmul.f32 %v94, %v94
    %v111 = vmul.f32 %v95, %v95
    %v112 = vadd.f32 %v108, 0.0
    %v113 = vadd.f32 %v109, 0.0
    %v114 = vadd.f32 %v110, 0.0
    %v115 = vadd.f32 %v111, 0.0
    %v116 = vmul.f32 %v96, %v96
    %v117 = vmul.f32 %v97, %v97
    %v118 = vmul.f32 %v98, %v98
    %v119 = vmul.f32 %v99, %v99
    %v120 = vadd.f32 %v116, 0.0
    %v121 = vadd.f32 %v117, 0.0
    %v122 = vadd.f32 %v118, 0.0
    %v123 = vadd.f32 %v119, 0.0
    %v124 = vmul.f32 %v92, %v96
    %v125 = vmul.f32 %v93, %v97
    %v126 = vmul.f32 %v94, %v98
    %v127 = vmul.f32 %v95, %v99
    %v128 = vadd.f32 %v124, 0.0
    %v129 = vadd.f32 %v125, 0.0
    %v130 = vadd.f32 %v126, 0.0
    %v131 = vadd.f32 %v127, 0.0
    %v132 = vld [vmem:[%s41 + $0x8] sm:$0xff]
    %v133 = vld [vmem:[%s41 + $0x18] sm:$0xff]
    %v134 = vld [vmem:[%s41 + $0x28] sm:$0xff]
    %v135 = vld [vmem:[%s41 + $0x38] sm:$0xff]
    %v136 = vld [vmem:[%s67 + $0x8] sm:$0xff]
    %v137 = vld [vmem:[%s67 + $0x18] sm:$0xff]
    %v138 = vld [vmem:[%s67 + $0x28] sm:$0xff]
    %v139 = vld [vmem:[%s67 + $0x38] sm:$0xff]
    %v140 = vsub.f32 %v132, %v49
    %v141 = vsub.f32 %v133, %v54
    %v142 = vsub.f32 %v134, %v59
    %v143 = vsub.f32 %v135, %v64
    %v144 = vsub.f32 %v136, %v75
    %v145 = vsub.f32 %v137, %v80
    %v146 = vsub.f32 %v138, %v85
    %v147 = vsub.f32 %v139, %v90
    %v148 = vadd.f32 %v100, %v140
    %v149 = vadd.f32 %v101, %v141
    %v150 = vadd.f32 %v102, %v142
    %v151 = vadd.f32 %v103, %v143
    %v152 = vadd.f32 %v104, %v144
    %v153 = vadd.f32 %v105, %v145
    %v154 = vadd.f32 %v106, %v146
    %v155 = vadd.f32 %v107, %v147
    %v156 = vmul.f32 %v140, %v140
    %v157 = vmul.f32 %v141, %v141
    %v158 = vmul.f32 %v142, %v142
    %v159 = vmul.f32 %v143, %v143
    %v160 = vadd.f32 %v112, %v156
    %v161 = vadd.f32 %v113, %v157
    %v162 = vadd.f32 %v114, %v158
    %v163 = vadd.f32 %v115, %v159
    %v164 = vmul.f32 %v144, %v144
    %v165 = vmul.f32 %v145, %v145
    %v166 = vmul.f32 %v146, %v146
    %v167 = vmul.f32 %v147, %v147
    %v168 = vadd.f32 %v120, %v164
    %v169 = vadd.f32 %v121, %v165
    %v170 = vadd.f32 %v122, %v166
    %v171 = vadd.f32 %v123, %v167
    %v172 = vmul.f32 %v140, %v144
    %v173 = vmul.f32 %v141, %v145
    %v174 = vmul.f32 %v142, %v146
    %v175 = vmul.f32 %v143, %v147
    %v176 = vadd.f32 %v128, %v172
    %v177 = vadd.f32 %v129, %v173
    %v178 = vadd.f32 %v130, %v174
    %v179 = vadd.f32 %v131, %v175
    %180 = vadd.xlane.f32.xlu0 %v148
    %v181 = vpop.xlane.xlu0 %180
    %182 = vadd.xlane.f32.xlu0 %v149
    %v183 = vpop.xlane.xlu0 %182
    %184 = vadd.xlane.f32.xlu0 %v150
    %v185 = vpop.xlane.xlu0 %184
    %186 = vadd.xlane.f32.xlu0 %v151
    %v187 = vpop.xlane.xlu0 %186
    %188 = vadd.xlane.f32.xlu0 %v152
    %v189 = vpop.xlane.xlu0 %188
    %190 = vadd.xlane.f32.xlu0 %v153
    %v191 = vpop.xlane.xlu0 %190
    %192 = vadd.xlane.f32.xlu0 %v154
    %v193 = vpop.xlane.xlu0 %192
    %194 = vadd.xlane.f32.xlu0 %v155
    %v195 = vpop.xlane.xlu0 %194
    %196 = vadd.xlane.f32.xlu0 %v160
    %v197 = vpop.xlane.xlu0 %196
    %198 = vadd.xlane.f32.xlu0 %v161
    %v199 = vpop.xlane.xlu0 %198
    %200 = vadd.xlane.f32.xlu0 %v162
    %v201 = vpop.xlane.xlu0 %200
    %202 = vadd.xlane.f32.xlu0 %v163
    %v203 = vpop.xlane.xlu0 %202
    %204 = vadd.xlane.f32.xlu0 %v168
    %v205 = vpop.xlane.xlu0 %204
    %206 = vadd.xlane.f32.xlu0 %v169
    %v207 = vpop.xlane.xlu0 %206
    %208 = vadd.xlane.f32.xlu0 %v170
    %v209 = vpop.xlane.xlu0 %208
    %210 = vadd.xlane.f32.xlu0 %v171
    %v211 = vpop.xlane.xlu0 %210
    %212 = vadd.xlane.f32.xlu0 %v176
    %v213 = vpop.xlane.xlu0 %212
    %214 = vadd.xlane.f32.xlu0 %v177
    %v215 = vpop.xlane.xlu0 %214
    %216 = vadd.xlane.f32.xlu0 %v178
    %v217 = vpop.xlane.xlu0 %216
    %218 = vadd.xlane.f32.xlu0 %v179
    %v219 = vpop.xlane.xlu0 %218
    %v220 = vmul.f32 %v181, 0.00390625
    %v221 = vmul.f32 %v183, 0.00390625
    %v222 = vmul.f32 %v185, 0.00390625
    %v223 = vmul.f32 %v187, 0.00390625
    %v224 = vmul.f32 %v189, 0.00390625
    %v225 = vmul.f32 %v191, 0.00390625
    %v226 = vmul.f32 %v193, 0.00390625
    %v227 = vmul.f32 %v195, 0.00390625
    %v228 = vmul.f32 %v197, 0.00390625
    %v229 = vmul.f32 %v199, 0.00390625
    %v230 = vmul.f32 %v201, 0.00390625
    %v231 = vmul.f32 %v203, 0.00390625
    %v232 = vmul.f32 %v220, %v220
    %v233 = vmul.f32 %v221, %v221
    %v234 = vmul.f32 %v222, %v222
    %v235 = vmul.f32 %v223, %v223
    %v236 = vsub.f32 %v228, %v232
    %v237 = vsub.f32 %v229, %v233
    %v238 = vsub.f32 %v230, %v234
    %v239 = vsub.f32 %v231, %v235
    %v240 = vadd.f32 %v236, 1e-05
    %v241 = vadd.f32 %v237, 1e-05
    %v242 = vadd.f32 %v238, 1e-05
    %v243 = vadd.f32 %v239, 1e-05
    %v244 = vmul.f32 %v205, 0.00390625
    %v245 = vmul.f32 %v207, 0.00390625
    %v246 = vmul.f32 %v209, 0.00390625
    %v247 = vmul.f32 %v211, 0.00390625
    %v248 = vmul.f32 %v224, %v224
    %v249 = vmul.f32 %v225, %v225
    %v250 = vmul.f32 %v226, %v226
    %v251 = vmul.f32 %v227, %v227
    %v252 = vsub.f32 %v244, %v248
    %v253 = vsub.f32 %v245, %v249
    %v254 = vsub.f32 %v246, %v250
    %v255 = vsub.f32 %v247, %v251
    %v256 = vadd.f32 %v252, 1e-05
    %v257 = vadd.f32 %v253, 1e-05
    %v258 = vadd.f32 %v254, 1e-05
    %v259 = vadd.f32 %v255, 1e-05
    %v260 = vmul.f32 %v220, 256.0
    %v261 = vmul.f32 %v221, 256.0
    %v262 = vmul.f32 %v222, 256.0
    %v263 = vmul.f32 %v223, 256.0
    %v264 = vmul.f32 %v260, %v224
    %v265 = vmul.f32 %v261, %v225
    %v266 = vmul.f32 %v262, %v226
    %v267 = vmul.f32 %v263, %v227
    %v268 = vsub.f32 %v213, %v264
    %v269 = vsub.f32 %v215, %v265
    %v270 = vsub.f32 %v217, %v266
    %v271 = vsub.f32 %v219, %v267
    %v272 = vrsqrt.pop %v240
    %v273 = vrsqrt.pop %v241
    %v274 = vrsqrt.pop %v242
    %v275 = vrsqrt.pop %v243
    %v276 = vmul.f32 %v268, %v272
    %v277 = vmul.f32 %v269, %v273
    %v278 = vmul.f32 %v270, %v274
    %v279 = vmul.f32 %v271, %v275
    %v280 = vrsqrt.pop %v256
    %v281 = vrsqrt.pop %v257
    %v282 = vrsqrt.pop %v258
    %v283 = vrsqrt.pop %v259
    %v284 = vmul.f32 %v276, %v280
    %v285 = vmul.f32 %v277, %v281
    %v286 = vmul.f32 %v278, %v282
    %v287 = vmul.f32 %v279, %v283
    %v288 = vmul.f32 %v284, 0.0009765625
    %v289 = vmul.f32 %v285, 0.0009765625
    %v290 = vmul.f32 %v286, 0.0009765625
    %v291 = vmul.f32 %v287, 0.0009765625
    %vm292 = vcmask 7168
    %293 = vst.msk [vmem:[#allocation6] sm:$0xff] %vm292, %v288
    %294 = vst.msk [vmem:[#allocation6 + $0x8] sm:$0xff] %vm292, %v289
    %295 = vst.msk [vmem:[#allocation6 + $0x10] sm:$0xff] %vm292, %v290
    %296 = vst.msk [vmem:[#allocation6 + $0x18] sm:$0xff] %vm292, %v291
    // Predicated region
    $region18: #{tpu_custom_call.1} parent=1 // pred_check
      _
    $region19: #{tpu_custom_call.1} parent=1 // pred_check_branch
      %298 = sbr.rel (0) target = $region21
    $region20: #{tpu_custom_call.1} parent=1 // pred_region
      // Predicated region
      $region22: #{tpu_custom_call.1} parent=20 // pred_check
        _
      $region23: #{tpu_custom_call.1} parent=20 // pred_check_branch
        %300 = sbr.rel (0) target = $region25
      $region24: #{tpu_custom_call.1} parent=20 // pred_region
        // Predicated region
        $region26: #{tpu_custom_call.1} parent=24 // pred_check
          _
        $region27: #{tpu_custom_call.1} parent=24 // pred_check_branch
          %302 = sbr.rel (0) target = $region29
        $region28: #{tpu_custom_call.1} parent=24 // pred_region
          // Predicated region
          $region41: #{tpu_custom_call.1} parent=28 // pred_check
            _
          $region42: #{tpu_custom_call.1} parent=28 // pred_check_branch
            %318 = sbr.rel (0) target = $region44
          $region43: #{tpu_custom_call.1} parent=28 // pred_region
            loop: start=0, step=1, limit=1
            $region45: #{tpu_custom_call.1} parent=43 // loop_pre_header
              _
            $region46: #{tpu_custom_call.1} parent=43 // loop_header
              %s320 = sphi 0, %s324
              %p321 = scmp.ge.s32.totalorder %s320, 1
              %s325 = sphi [#allocation6], [#allocation6]
              %s326 = sphi %s2, %s2
            $region47: #{tpu_custom_call.1} parent=43 // loop_header_branch
              %323 = sbr.rel (%p321) target = $region51
            $region48: #{tpu_custom_call.1} parent=43 // loop_body
              %v327 = vld [vmem:[%s325] sm:$0xff]
              %328 = vst [vmem:[%s326] sm:$0xff] %v327
            $region49: #{tpu_custom_call.1} parent=43 // loop_footer
              %s324 = sadd.s32 1, %s320
            $region50: #{tpu_custom_call.1} parent=43 // loop_footer_branch
              %319 = sbr.rel target = $region46
            $region51: #{tpu_custom_call.1} parent=43 // loop_exit
              _
          $region44: #{tpu_custom_call.1} parent=28 // pred_fallthru
            _
          // Predicated region
          $region52: #{tpu_custom_call.1} parent=28 // pred_check
            _
          $region53: #{tpu_custom_call.1} parent=28 // pred_check_branch
            %330 = sbr.rel target = $region55
          $region54: #{tpu_custom_call.1} parent=28 // pred_region
            _
          $region55: #{tpu_custom_call.1} parent=28 // pred_fallthru
            _
        $region29: #{tpu_custom_call.1} parent=24 // pred_fallthru
          _
        // Predicated region
        $region30: #{tpu_custom_call.1} parent=24 // pred_check
          _
        $region31: #{tpu_custom_call.1} parent=24 // pred_check_branch
          %304 = sbr.rel target = $region33
        $region32: #{tpu_custom_call.1} parent=24 // pred_region
          %s306 = ssub.s32 256, 1
          loop: start=0, step=1, limit=1
          $region34: #{tpu_custom_call.1} parent=32 // loop_pre_header
            _
          $region35: #{tpu_custom_call.1} parent=32 // loop_header
            %s308 = sphi 0, %s312
            %p309 = scmp.ge.s32.totalorder %s308, 1
            %s313 = sphi [#allocation6], [#allocation6]
            %s314 = sphi %s2, %s2
          $region36: #{tpu_custom_call.1} parent=32 // loop_header_branch
            %311 = sbr.rel (%p309) target = $region40
          $region37: #{tpu_custom_call.1} parent=32 // loop_body
            %v315 = vld [vmem:[%s313] sm:%s306]
            %316 = vst [vmem:[%s314] sm:%s306] %v315
          $region38: #{tpu_custom_call.1} parent=32 // loop_footer
            %s312 = sadd.s32 1, %s308
          $region39: #{tpu_custom_call.1} parent=32 // loop_footer_branch
            %307 = sbr.rel target = $region35
          $region40: #{tpu_custom_call.1} parent=32 // loop_exit
            _
        $region33: #{tpu_custom_call.1} parent=24 // pred_fallthru
          _
      $region25: #{tpu_custom_call.1} parent=20 // pred_fallthru
        _
      %331 = vnop
    $region21: #{tpu_custom_call.1} parent=1 // pred_fallthru
      _
    // Predicated region
    $region56: #{tpu_custom_call.1} parent=1 // pred_check
      _
    $region57: #{tpu_custom_call.1} parent=1 // pred_check_branch
      %333 = sbr.rel (0) target = $region59
    $region58: #{tpu_custom_call.1} parent=1 // pred_region
      _
    $region59: #{tpu_custom_call.1} parent=1 // pred_fallthru
      _
    %334 = vsyncpa [#allocation3], 1
    %335 = vsyncpa [#allocation5], 1

</llo_original>
